<compile_context>
chip_gen: v5e
topology: v5e:2x2
jax: 0.10.0
libtpu: 0.0.40
codegen_flags: <defaults>
</compile_context>

<pallas_src>
import functools

import jax
import jax.numpy as jnp
from jax.experimental import pallas as pl
from jax.experimental.pallas import tpu as pltpu


def _round_up(x, m):
    return (x + m - 1) // m * m


def _pick_tn(Dp):
    """Largest N tile (multiple of 128, exact divisor of Dp) with grid >= 2."""
    for tn in (512, 256, 128):
        if Dp % tn == 0 and Dp // tn >= 2:
            return tn
    return 128  # Dp == 128 -> single tile, nothing to split


def _pick_tk(Dp, tn, weight_budget_bytes=16 << 20):
    """Largest K tile (divisor of Dp) whose double-buffered weight block fits."""
    for tk in (Dp, 8192, 4096, 2048, 1024, 512, 256, 128):
        if tk <= Dp and Dp % tk == 0 and 2 * tn * tk * 4 <= weight_budget_bytes:
            return tk
    return 128


def _linear_kernel(x_ref, w_ref, b_ref, o_ref, acc_ref):
    """One (N-tile, K-tile) step of y = x @ W + b  (W already (K, N)).

    x_ref:   (Bp, tk)  input K slab
    w_ref:   (tk, tn)  weight block, (in, out) layout -> canonical contraction
    b_ref:   (1,  tn)  bias tile
    o_ref:   (Bp, tn)  output tile (written on last K step)
    acc_ref: (Bp, tn)  f32 accumulator scratch
    """
    k = pl.program_id(1)

    @pl.when(k == 0)
    def _():
        acc_ref[...] = jnp.zeros_like(acc_ref)

    acc_ref[...] += jax.lax.dot_general(
        x_ref[...], w_ref[...],
        dimension_numbers=(((1,), (0,)), ((), ())),   # x @ W, no transpose
        preferred_element_type=jnp.float32,
    )

    @pl.when(k == pl.num_programs(1) - 1)
    def _():
        o_ref[...] = (acc_ref[...] + b_ref[...].astype(jnp.float32)).astype(
            o_ref.dtype)


def _linear_padded(x_p, w_p, b_p):
    """y_p = x_p @ w_p + b_p on padded, lane-dense operands."""
    Bp, Dp = x_p.shape
    tn = _pick_tn(Dp)
    tk = _pick_tk(Dp, tn)
    grid = (Dp // tn, Dp // tk)

    vmem_bytes = (
        2 * tn * tk * 4        # weight double buffer (dominant)
        + 2 * Bp * tk * 4      # x double buffer
        + 2 * Bp * tn * 4      # output double buffer
        + Bp * tn * 4          # accumulator scratch
        + 2 * tn * 4           # bias
    )
    vmem_limit = min(max(int(vmem_bytes * 1.5) + (2 << 20), 8 << 20), 100 << 20)

    return pl.pallas_call(
        _linear_kernel,
        out_shape=jax.ShapeDtypeStruct((Bp, Dp), x_p.dtype),
        grid=grid,
        in_specs=[
            pl.BlockSpec((Bp, tk), lambda j, k: (0, k)),   # x: K slabs
            pl.BlockSpec((tk, tn), lambda j, k: (k, j)),   # W: (K, N) blocks
            pl.BlockSpec((1, tn), lambda j, k: (0, j)),    # bias tile j
        ],
        out_specs=pl.BlockSpec((Bp, tn), lambda j, k: (0, j)),
        scratch_shapes=[pltpu.VMEM((Bp, tn), jnp.float32)],
        compiler_params=pltpu.CompilerParams(
            dimension_semantics=("parallel", "arbitrary"),
            vmem_limit_bytes=vmem_limit,
        ),
    )(x_p, w_p, b_p)


def make_initial_velocity(weight, bias):
    """Pre-pads (once) the PyTorch Linear params and returns apply(x0).

    weight: (D, D) float32, PyTorch (out_features, in_features) layout
    bias:   (D,)   float32
    Returned apply(x0): (B, D) -> (2B, D) == cat([x0, x0 @ W.T + b], axis=0)
    """
    D_out, D_in = weight.shape
    assert D_out == D_in, "initial_velocity uses a square Linear"
    D = D_in
    assert bias.shape == (D,)
    Dp = _round_up(D, 128)

    # Pad + transpose ONCE: store as (in=K, out=N) so the kernel contracts
    # canonically (x @ W) with no in-kernel transpose.
    w_p = jnp.zeros((Dp, Dp), weight.dtype).at[:D, :D].set(weight.T)
    b_p = jnp.zeros((1, Dp), bias.dtype).at[0, :D].set(bias)

    def apply(x0):
        B, Dx = x0.shape
        assert Dx == D
        Bp = _round_up(B, 8)

        aligned = (B == Bp) and (D == Dp)
        if aligned:
            x_p = x0                                       # fast path: no pad copy
        else:
            x_p = jnp.zeros((Bp, Dp), x0.dtype).at[:B, :D].set(x0)

        y_p = _linear_padded(x_p, w_p, b_p)
        y = y_p if aligned else y_p[:B, :D]

        # x0 passthrough / concat stays in XLA (no redundant in-kernel copy).
        return jnp.concatenate([x0, y], axis=0)

    return apply


def initial_velocity(x0, weight, bias):
    """One-shot convenience wrapper (pads params on every call; prefer
    make_initial_velocity for repeated use)."""
    return make_initial_velocity(weight, bias)(x0)


def _reference(x0, weight, bias):
    out = x0 @ weight.T + bias
    return jnp.concatenate([x0, out], axis=0)


if __name__ == "__main__":
    key = jax.random.PRNGKey(0)

    def _run_case(key, B, D):
        kx, kw, kb = jax.random.split(key, 3)
        x0 = jax.random.normal(kx, (B, D), dtype=jnp.float32)
        # Deterministic PyTorch-style Linear init: U(-1/sqrt(dim), 1/sqrt(dim)).
        bound = 1.0 / jnp.sqrt(jnp.float32(D))
        weight = jax.random.uniform(kw, (D, D), minval=-bound, maxval=bound,
                                    dtype=jnp.float32)
        bias = jax.random.uniform(kb, (D,), minval=-bound, maxval=bound,
                                  dtype=jnp.float32)

        apply_fn = jax.jit(make_initial_velocity(weight, bias))
        out = jax.block_until_ready(apply_fn(x0))

        ref = _reference(x0, weight, bias)
        assert out.shape == (2 * B, D), out.shape
        assert jnp.allclose(out, ref, atol=1e-5, rtol=1e-5), \
            f"mismatch vs reference (B={B}, D={D})"

    k1, k2 = jax.random.split(key)
    _run_case(k1, B=8, D=32)    # unaligned D -> pad path, grid_n = 1
    _run_case(k2, B=5, D=200)   # unaligned B and D -> pad path, grid_n = 2

    print("KERNEL_OK")
</pallas_src>

<mosaic_0001>
module attributes {stable_mosaic.version = 11 : i64} {
  func.func @_linear_kernel(%arg0: i32, %arg1: i32, %arg2: memref<8x128xf32, #tpu.memory_space<vmem>>, %arg3: memref<128x128xf32, #tpu.memory_space<vmem>>, %arg4: memref<1x128xf32, #tpu.memory_space<vmem>>, %arg5: memref<8x128xf32, #tpu.memory_space<vmem>>, %arg6: memref<8x128xf32, #tpu.memory_space<vmem>>) attributes {dimension_semantics = [#tpu.dimension_semantics<parallel>, #tpu.dimension_semantics<arbitrary>], iteration_bounds = array<i64: 1, 1>, scalar_prefetch = 0 : i64, scratch_operands = 1 : i64, tpu.core_type = #tpu.core_type<tc>, window_params = [{transform_indices = @transform_0, window_bounds = array<i64: 8, 128>}, {transform_indices = @transform_1, window_bounds = array<i64: 128, 128>}, {transform_indices = @transform_2, window_bounds = array<i64: 1, 128>}, {transform_indices = @transform_3, window_bounds = array<i64: 8, 128>}]} {
    %c0_i32 = arith.constant 0 : i32
    %0 = arith.cmpi eq, %arg1, %c0_i32 : i32
    %1 = arith.extui %0 : i1 to i32
    %c0_i32_0 = arith.constant 0 : i32
    %2 = arith.cmpi ne, %1, %c0_i32_0 : i32
    scf.if %2 {
      %cst_10 = arith.constant 0.000000e+00 : f32
      %12 = vector.broadcast %cst_10 : f32 to vector<8x128xf32>
      %c0_11 = arith.constant 0 : index
      %c0_12 = arith.constant 0 : index
      %13 = vector.load %arg6[%c0_11, %c0_12] : memref<8x128xf32, #tpu.memory_space<vmem>>, vector<8x128xf32>
      tpu.vector_store %arg6[%c0_11, %c0_12], %12 {strides = array<i32>} : memref<8x128xf32, #tpu.memory_space<vmem>>, vector<8x128xf32>,
    } else {
    }
    %c0 = arith.constant 0 : index
    %c0_1 = arith.constant 0 : index
    %3 = vector.load %arg6[%c0, %c0_1] : memref<8x128xf32, #tpu.memory_space<vmem>>, vector<8x128xf32>
    %c0_2 = arith.constant 0 : index
    %c0_3 = arith.constant 0 : index
    %4 = vector.load %arg2[%c0_2, %c0_3] : memref<8x128xf32, #tpu.memory_space<vmem>>, vector<8x128xf32>
    %c0_4 = arith.constant 0 : index
    %c0_5 = arith.constant 0 : index
    %5 = vector.load %arg3[%c0_4, %c0_5] : memref<128x128xf32, #tpu.memory_space<vmem>>, vector<128x128xf32>
    %cst = arith.constant dense<0.000000e+00> : vector<8x128xf32>
    %6 = tpu.matmul %4, %5, %cst {dimension_numbers = #tpu.dot_dimension_numbers<[1], [0], [0], [1], [0, 0, 1, 1], [], []>} : vector<8x128xf32>, vector<128x128xf32>, vector<8x128xf32> -> vector<8x128xf32>
    %7 = arith.addf %3, %6 : vector<8x128xf32>
    %c0_6 = arith.constant 0 : index
    %c0_7 = arith.constant 0 : index
    %8 = vector.load %arg6[%c0_6, %c0_7] : memref<8x128xf32, #tpu.memory_space<vmem>>, vector<8x128xf32>
    tpu.vector_store %arg6[%c0_6, %c0_7], %7 {strides = array<i32>} : memref<8x128xf32, #tpu.memory_space<vmem>>, vector<8x128xf32>,
    %c0_i32_8 = arith.constant 0 : i32
    %9 = arith.cmpi eq, %arg1, %c0_i32_8 : i32
    %10 = arith.extui %9 : i1 to i32
    %c0_i32_9 = arith.constant 0 : i32
    %11 = arith.cmpi ne, %10, %c0_i32_9 : i32
    scf.if %11 {
      %c0_10 = arith.constant 0 : index
      %c0_11 = arith.constant 0 : index
      %12 = vector.load %arg6[%c0_10, %c0_11] : memref<8x128xf32, #tpu.memory_space<vmem>>, vector<8x128xf32>
      %c0_12 = arith.constant 0 : index
      %c0_13 = arith.constant 0 : index
      %13 = vector.load %arg4[%c0_12, %c0_13] : memref<1x128xf32, #tpu.memory_space<vmem>>, vector<1x128xf32>
      %14 = vector.broadcast %13 : vector<1x128xf32> to vector<8x128xf32>
      %15 = arith.addf %12, %14 : vector<8x128xf32>
      %c0_14 = arith.constant 0 : index
      %c0_15 = arith.constant 0 : index
      %16 = vector.load %arg5[%c0_14, %c0_15] : memref<8x128xf32, #tpu.memory_space<vmem>>, vector<8x128xf32>
      tpu.vector_store %arg5[%c0_14, %c0_15], %15 {strides = array<i32>} : memref<8x128xf32, #tpu.memory_space<vmem>>, vector<8x128xf32>,
    } else {
    }
    return
  }
  func.func @transform_0(%arg0: i32, %arg1: i32) -> (i32, i32) {
    %c0_i32 = arith.constant 0 : i32
    %c0_i32_0 = arith.constant 0 : i32
    return %c0_i32, %arg1 : i32, i32
  }
  func.func @transform_1(%arg0: i32, %arg1: i32) -> (i32, i32) {
    %c0_i32 = arith.constant 0 : i32
    return %arg1, %arg0 : i32, i32
  }
  func.func @transform_2(%arg0: i32, %arg1: i32) -> (i32, i32) {
    %c0_i32 = arith.constant 0 : i32
    %c0_i32_0 = arith.constant 0 : i32
    return %c0_i32, %arg0 : i32, i32
  }
  func.func @transform_3(%arg0: i32, %arg1: i32) -> (i32, i32) {
    %c0_i32 = arith.constant 0 : i32
    %c0_i32_0 = arith.constant 0 : i32
    return %c0_i32, %arg0 : i32, i32
  }
}

</mosaic_0001>

<llo_original>
// kernel: apply.1
$region0: #{apply.1}
  #allocation0 [shape = 'u32[]', space=smem, size = 0x4, offset = 0x4, fixed_abs, tag = 'smem constant byte address 0x4 - core index']
  #allocation1 [shape = 'u32[72,128]{1,0:T(1,128)}', space=vmem, size = 0x9000, scoped, tag = 'internal scratch']
  #allocation2 [shape = 'f32[8,128]{1,0:T(8,128)}', space=vmem, size = 0x1000, scoped, tag = 'scratch operand']
  %s0 = inlined_call_operand.vmem [shape: f32[8,128], index: 0, kind: input, shape index: {}]
  %s1 = inlined_call_operand.hbm [shape: f32[128,128], index: 1, kind: input, shape index: {}]
  %s2 = inlined_call_operand.vmem [shape: f32[1,128], index: 2, kind: input, shape index: {}]
  %s3 = inlined_call_operand.vmem [shape: f32[8,128], index: 3, kind: output, shape index: {}]
  %s4 = sld [smem:[#allocation0]]
  $region34: #{apply.1} parent=0
    _
  %s6 = ssub.s32 1, %s4
  %s7 = scalar_select 0, %s6, %s4
  $region1: #{apply.1} parent=0
    #allocation3 [shape = 'u8[65536]{0}', space=vmem, size = 0x10000, scoped, tag = 'input window, operand 1, single buffered']
    #allocation4 [shape = 's32[1]{0}', space=sflag, size = 0x4, scoped, tag = 'scoped memory for apply.1']
    %8 = vsyncpa [#allocation4], 0
    // Predicated region
    $region2: #{apply.1} parent=1 // pred_check
      _
    $region3: #{apply.1} parent=1 // pred_check_branch
      %10 = sbr.rel (0) target = $region5
    $region4: #{apply.1} parent=1 // pred_region
      _
    $region5: #{apply.1} parent=1 // pred_fallthru
      _
    // Predicated region
    $region6: #{apply.1} parent=1 // pred_check
      _
    $region7: #{apply.1} parent=1 // pred_check_branch
      %12 = sbr.rel (0) target = $region9
    $region8: #{apply.1} parent=1 // pred_region
      %14 = vsyncadd [#allocation4], 0
      %s15 = sshll.u32 %s1, 4
      %s16 = int_to_ptr.hbm [resolvable:$true] %s15
      %s17 = sshll.u32 [#allocation3], 4
      %s18 = int_to_ptr.vmem [resolvable:$true] %s17
      %23 = dma.hbm_to_vmem [thread:$0]  %s16, 2048, %s18, [#allocation4], 128, 128, 8
    $region9: #{apply.1} parent=1 // pred_fallthru
      _
    // Predicated region
    $region10: #{apply.1} parent=1 // pred_check
      _
    $region11: #{apply.1} parent=1 // pred_check_branch
      %25 = sbr.rel (0) target = $region13
    $region12: #{apply.1} parent=1 // pred_region
      _
    $region13: #{apply.1} parent=1 // pred_fallthru
      _
    // Predicated region
    $region14: #{apply.1} parent=1 // pred_check
      _
    $region15: #{apply.1} parent=1 // pred_check_branch
      %27 = sbr.rel (0) target = $region17
    $region16: #{apply.1} parent=1 // pred_region
      %29 = dma.done [#allocation4], 2048
    $region17: #{apply.1} parent=1 // pred_fallthru
      _
    %p30 = scmp.eq.s32.totalorder 0, 0
    // Predicated region
    $region18: #{apply.1} parent=1 // pred_check
      %p31 = pneg %p30
    $region19: #{apply.1} parent=1 // pred_check_branch
      %33 = sbr.rel (%p31) target = $region21
    $region20: #{apply.1} parent=1 // pred_region
      %34 = vst [vmem:[#allocation2] sm:$0xff] 0.0
    $region21: #{apply.1} parent=1 // pred_fallthru
      _
    %v35 = vld [vmem:[#allocation2] sm:$0xff]
    %v36 = vld [vmem:[%s0] sm:$0xff]
    %v37 = vld [vmem:[#allocation3] sm:$0xff]
    %v38 = vld [vmem:[#allocation3 + $0x8] sm:$0xff]
    %v39 = vld [vmem:[#allocation3 + $0x10] sm:$0xff]
    %v40 = vld [vmem:[#allocation3 + $0x18] sm:$0xff]
    %v41 = vld [vmem:[#allocation3 + $0x20] sm:$0xff]
    %v42 = vld [vmem:[#allocation3 + $0x28] sm:$0xff]
    %v43 = vld [vmem:[#allocation3 + $0x30] sm:$0xff]
    %v44 = vld [vmem:[#allocation3 + $0x38] sm:$0xff]
    %v45 = vld [vmem:[#allocation3 + $0x40] sm:$0xff]
    %v46 = vld [vmem:[#allocation3 + $0x48] sm:$0xff]
    %v47 = vld [vmem:[#allocation3 + $0x50] sm:$0xff]
    %v48 = vld [vmem:[#allocation3 + $0x58] sm:$0xff]
    %v49 = vld [vmem:[#allocation3 + $0x60] sm:$0xff]
    %v50 = vld [vmem:[#allocation3 + $0x68] sm:$0xff]
    %v51 = vld [vmem:[#allocation3 + $0x70] sm:$0xff]
    %v52 = vld [vmem:[#allocation3 + $0x78] sm:$0xff]
    %53 = vmatpush.msra.mxu0 %v52
    %54 = vmatpush.msra.mxu0 %v51
    %55 = vmatpush.msra.mxu0 %v50
    %56 = vmatpush.msra.mxu0 %v49
    %57 = vmatpush.msra.mxu0 %v48
    %58 = vmatpush.msra.mxu0 %v47
    %59 = vmatpush.msra.mxu0 %v46
    %60 = vmatpush.msra.mxu0 %v45
    %61 = vmatpush.msra.mxu0 %v44
    %62 = vmatpush.msra.mxu0 %v43
    %63 = vmatpush.msra.mxu0 %v42
    %64 = vmatpush.msra.mxu0 %v41
    %65 = vmatpush.msra.mxu0 %v40
    %66 = vmatpush.msra.mxu0 %v39
    %67 = vmatpush.msra.mxu0 %v38
    %68 = vmatpush.msra.mxu0 %v37
    %69 = vmatmul.f32.gmra.mxu0 %v36
    %v70 = vpop.f32.mrf.mxu0
    %v71 = vadd.f32 0.0, %v70
    %72 = vdwg.mxu0
    %v73 = vadd.f32 %v35, %v71
    %74 = vst [vmem:[#allocation2] sm:$0xff] %v73
    // Predicated region
    $region22: #{apply.1} parent=1 // pred_check
      %p75 = pneg %p30
    $region23: #{apply.1} parent=1 // pred_check_branch
      %77 = sbr.rel (%p75) target = $region25
    $region24: #{apply.1} parent=1 // pred_region
      %v78 = vld [vmem:[#allocation2] sm:$0xff]
      %v79 = vld [vmem:[%s2] sm:$0x1]
      %v81 = vperm.slane %v79, 0
      %v83 = vadd.f32 %v78, %v81
      %84 = vst [vmem:[%s3] sm:$0xff] %v83
    $region25: #{apply.1} parent=1 // pred_fallthru
      _
    // Predicated region
    $region26: #{apply.1} parent=1 // pred_check
      _
    $region27: #{apply.1} parent=1 // pred_check_branch
      %86 = sbr.rel (0) target = $region29
    $region28: #{apply.1} parent=1 // pred_region
      _
    $region29: #{apply.1} parent=1 // pred_fallthru
      _
    // Predicated region
    $region30: #{apply.1} parent=1 // pred_check
      _
    $region31: #{apply.1} parent=1 // pred_check_branch
      %88 = sbr.rel (0) target = $region33
    $region32: #{apply.1} parent=1 // pred_region
      _
    $region33: #{apply.1} parent=1 // pred_fallthru
      _
    %89 = vsyncpa [#allocation4], 1

</llo_original>
